<compile_context>
chip_gen: v5e
topology: v5e:2x2
jax: 0.10.0
libtpu: 0.0.40
codegen_flags: <defaults>
</compile_context>

<pallas_src>
import functools

import jax
import jax.numpy as jnp
from jax.experimental import pallas as pl
from jax.experimental.pallas import tpu as pltpu

NEG_INF = -1e9          # matches alpha.masked_fill(mask.eq(0), -1e9)
LOC_PAD = 128           # lane-dense padded width for the (B, 2) loc output


def _round_up(x, m):
    return ((x + m - 1) // m) * m


def _apply_head(z, logic_head):
    """Static (trace-time) dispatch of the `getattr(nn, logic_head)()` layer."""
    if logic_head == "Sigmoid":
        return jax.nn.sigmoid(z)
    if logic_head == "Tanh":
        return jnp.tanh(z)
    if logic_head == "ReLU":
        return jnp.maximum(z, 0.0)
    if logic_head == "Identity":
        return z
    # TODO(synk): other nn.* logic heads (e.g. Softmax over a dim) not ported.
    raise NotImplementedError(f"logic_head={logic_head!r} not supported")


def _lgi_kernel(logic_head,
                feats_ref, mask_ref,
                w_f2a_ref, w_alpha_ref, w_fc_ref, b_fc_ref,
                w1_ref, b1_ref, w2_ref, b2_ref,
                attw_ref, loc_ref):
    """Fused LGIPredictor forward for one batch tile.

    feats_ref  : (TB, S, D)   bf16 segment features
    mask_ref   : (TB, S)      f32 segment validity mask (0 = invalid/padded)
    w_f2a_ref  : (D, Hp)      bf16 AttentivePooling.feat2att (H zero-padded to Hp)
    w_alpha_ref: (1, 1, Hp)   f32  AttentivePooling.to_alpha (zero-padded)
    w_fc_ref   : (D, D)       bf16 AttentivePooling.fc
    b_fc_ref   : (1, D)       f32
    w1_ref     : (D, D)       bf16 MLP_reg[0]
    b1_ref     : (1, D)       f32
    w2_ref     : (D, LOC_PAD) bf16 MLP_reg[2], zero-padded from 2 -> LOC_PAD cols
    b2_ref     : (1, LOC_PAD) f32
    attw_ref   : (TB, S)      out: temporal attention weights (f32)
    loc_ref    : (TB, LOC_PAD)out: logic_head(MLP_reg(...)), cols 0:2 valid
    """
    TB, S, D = feats_ref.shape
    Hp = w_f2a_ref.shape[1]

    # ---------------- AttentivePooling: attention scores ----------------
    feats = feats_ref[...]                                   # (TB, S, D) bf16
    # Leading-dim-only merge; S is padded to the bf16 sublane tile so the
    # (sublane, lane) layout of the last two dims is preserved (no relayout).
    x2 = feats.reshape(TB * S, D)
    # bf16 x bf16 -> f32 accumulate: native MXU path.
    a2 = jnp.tanh(jnp.dot(x2, w_f2a_ref[...],
                          preferred_element_type=jnp.float32))   # (TB*S, Hp)
    a3 = a2.reshape(TB, S, Hp)
    alpha = jnp.sum(a3 * w_alpha_ref[...], axis=-1)          # (TB, S) f32

    # masked_fill(mask == 0, -1e9)
    alpha = jnp.where(mask_ref[...] == 0.0, NEG_INF, alpha)

    # softmax over segments (lane axis), f32
    m = jnp.max(alpha, axis=-1, keepdims=True)
    e = jnp.exp(alpha - m)
    attw = e / jnp.sum(e, axis=-1, keepdims=True)            # (TB, S)
    attw_ref[...] = attw

    # ------------- AttentivePooling: weighted sum + embedding fc ---------
    # Transient f32 upcast only at the point of use (no kernel-long f32 slab);
    # reduction over S accumulates in f32.
    pooled = jnp.sum(feats.astype(jnp.float32) * attw[:, :, None], axis=1)
    emb = jnp.dot(pooled.astype(jnp.bfloat16), w_fc_ref[...],
                  preferred_element_type=jnp.float32) + b_fc_ref[...]   # (TB, D)

    # ------------- MLP_reg: Linear -> ReLU -> Linear -> head -------------
    h = jnp.maximum(jnp.dot(emb.astype(jnp.bfloat16), w1_ref[...],
                            preferred_element_type=jnp.float32) + b1_ref[...],
                    0.0)
    z = jnp.dot(h.astype(jnp.bfloat16), w2_ref[...],
                preferred_element_type=jnp.float32) + b2_ref[...]   # (TB, LOC_PAD)
    loc_ref[...] = _apply_head(z, logic_head)


def _plan_tiles(B, S_pad, D, Hp):
    """Pick the batch tile TB from a VMEM budget and size vmem_limit_bytes."""
    B8 = _round_up(B, 8)

    # Per-batch-row VMEM bytes per grid step.
    per_row = (2 * S_pad * D * 2          # feats bf16, double-buffered
               + 2 * S_pad * 4            # mask f32, double-buffered
               + 2 * S_pad * 4            # attw out, double-buffered
               + 2 * LOC_PAD * 4          # loc out, double-buffered
               + S_pad * Hp * 4           # f32 projection activations (a2/a3)
               + S_pad * D * 4            # transient f32 feats upcast (pooling)
               + 8 * D * 4)               # small per-row vectors
    # Grid-invariant weights (still double-buffered by the pipeline).
    weight_bytes = 2 * (D * Hp * 2 + Hp * 4
                        + 2 * (D * D * 2 + D * 4)
                        + D * LOC_PAD * 2 + LOC_PAD * 4)

    budget = 24 << 20                     # conservative across v5e/v6e/v7x
    avail = max(budget - weight_bytes, 2 << 20)
    tb = max(8, min(128, int(avail // per_row) // 8 * 8))
    tb = min(tb, B8)
    # Make the grid at least 2 steps when the batch allows, so the 'parallel'
    # axis can shard across v7x's two TensorCores.
    if B8 >= 16 and B8 <= tb:
        tb = _round_up((B8 + 1) // 2, 8)
    b_pad = _round_up(B, tb)

    est = weight_bytes + tb * per_row
    vmem_limit = int(min(max(int(1.5 * est), 32 << 20), 64 << 20))
    # TODO(synk): if a single 8-row slab already exceeds ~64 MiB (huge S*D on
    # v7x), an additional segment-axis grid with an online softmax is needed.
    return tb, b_pad, vmem_limit


@functools.partial(
    jax.jit,
    static_argnames=("logic_head", "TB", "B_pad", "S_pad", "vmem_limit"))
def _lgi_forward(feats, masks,
                 w_f2a, w_alpha, w_fc, b_fc, w1, b1, w2, b2,
                 *, logic_head, TB, B_pad, S_pad, vmem_limit):
    B, S, D = feats.shape
    Hp = w_f2a.shape[1]

    feats_bf = feats.astype(jnp.bfloat16)
    masks_f = masks.astype(jnp.float32)
    if (B_pad, S_pad) != (B, S):
        # Pad batch / segment axes; padded segments get mask=0, so the in-kernel
        # masked softmax gives them exactly zero weight. Padded batch rows are
        # finite garbage and are sliced off below. (Fuses with the bf16 cast
        # under jit — single HBM pass.)
        feats_bf = jnp.pad(feats_bf, ((0, B_pad - B), (0, S_pad - S), (0, 0)))
        masks_f = jnp.pad(masks_f, ((0, B_pad - B), (0, S_pad - S)))

    grid = (B_pad // TB,)
    kern = functools.partial(_lgi_kernel, logic_head)
    attw_p, loc_p = pl.pallas_call(
        kern,
        out_shape=(
            jax.ShapeDtypeStruct((B_pad, S_pad), jnp.float32),
            jax.ShapeDtypeStruct((B_pad, LOC_PAD), jnp.float32),
        ),
        grid=grid,
        in_specs=[
            pl.BlockSpec((TB, S_pad, D), lambda i: (i, 0, 0)),   # feats (bf16)
            pl.BlockSpec((TB, S_pad), lambda i: (i, 0)),         # masks
            pl.BlockSpec((D, Hp), lambda i: (0, 0)),             # w_f2a (bf16)
            pl.BlockSpec((1, 1, Hp), lambda i: (0, 0, 0)),       # w_alpha
            pl.BlockSpec((D, D), lambda i: (0, 0)),              # w_fc (bf16)
            pl.BlockSpec((1, D), lambda i: (0, 0)),              # b_fc
            pl.BlockSpec((D, D), lambda i: (0, 0)),              # w1 (bf16)
            pl.BlockSpec((1, D), lambda i: (0, 0)),              # b1
            pl.BlockSpec((D, LOC_PAD), lambda i: (0, 0)),        # w2 (bf16, padded)
            pl.BlockSpec((1, LOC_PAD), lambda i: (0, 0)),        # b2 (padded)
        ],
        out_specs=(
            pl.BlockSpec((TB, S_pad), lambda i: (i, 0)),
            pl.BlockSpec((TB, LOC_PAD), lambda i: (i, 0)),
        ),
        compiler_params=pltpu.CompilerParams(
            dimension_semantics=("parallel",),
            vmem_limit_bytes=vmem_limit),
    )(feats_bf, masks_f, w_f2a, w_alpha, w_fc, b_fc, w1, b1, w2, b2)

    return loc_p[:B, :2], attw_p[:B, :S]


class LGIPredictorPallas:
    """JAX/Pallas port of LGIPredictor (causal=False)."""

    def __init__(self, visual_hidden_dim, grounding_hidden_dim, num_segment,
                 logic_head, causal, tau, gamma, alpha, *, key,
                 batch_tile=None):
        if causal:
            # TODO(synk): causal=True path (EMA buffer `d`, F.normalize,
            # cosine-similarity debias scaled by alpha) is not implemented.
            raise NotImplementedError("causal=True is not supported in this port")
        assert visual_hidden_dim == grounding_hidden_dim, (
            "MLP_reg consumes the tatt embedding output, so dims must match")
        self.D = visual_hidden_dim
        self.H = visual_hidden_dim // 2
        self.Hp = _round_up(max(self.H, 1), 128)   # lane-dense projection width
        self.num_segment = num_segment
        self.logic_head = logic_head
        self.tau, self.gamma, self.alpha = tau, gamma, alpha
        self.batch_tile = batch_tile

        D, H, Hp = self.D, self.H, self.Hp
        ks = jax.random.split(key, 8)

        def lin(k, fan_in, shape):
            bound = 1.0 / (fan_in ** 0.5)
            return jax.random.uniform(k, shape, jnp.float32, -bound, bound)

        # AttentivePooling weights (num_layer=1, use_embedding=True, emb_dim=D)
        self.w_f2a = lin(ks[0], D, (D, H))       # feat2att (no bias)
        self.w_alpha = lin(ks[1], H, (H,))       # to_alpha (no bias)
        self.w_fc = lin(ks[2], D, (D, D))        # fc
        self.b_fc = lin(ks[3], D, (D,))
        # MLP_reg
        self.w1 = lin(ks[4], D, (D, D))
        self.b1 = lin(ks[5], D, (D,))
        self.w2 = lin(ks[6], D, (D, 2))
        self.b2 = lin(ks[7], D, (2,))

        # -------- kernel-side weight layout (done once, not per call) --------
        # bf16 large weights (native MXU path); biases stay f32.
        # feat2att: zero-pad H -> Hp columns (tanh(0)*0 contributes nothing).
        self.k_w_f2a = (jnp.zeros((D, Hp), jnp.bfloat16)
                        .at[:, :H].set(self.w_f2a.astype(jnp.bfloat16)))
        self.k_w_alpha = (jnp.zeros((1, 1, Hp), jnp.float32)
                          .at[0, 0, :H].set(self.w_alpha))
        self.k_w_fc = self.w_fc.astype(jnp.bfloat16)
        self.k_b_fc = self.b_fc[None, :]
        self.k_w1 = self.w1.astype(jnp.bfloat16)
        self.k_b1 = self.b1[None, :]
        # Lane-dense regression head: pad the 2 output columns to LOC_PAD.
        self.k_w2 = (jnp.zeros((D, LOC_PAD), jnp.bfloat16)
                     .at[:, :2].set(self.w2.astype(jnp.bfloat16)))
        self.k_b2 = (jnp.zeros((1, LOC_PAD), jnp.float32)
                     .at[0, :2].set(self.b2))

    def __call__(self, semantic_aware_seg_feats, seg_masks):
        feats = jnp.asarray(semantic_aware_seg_feats)
        masks = jnp.asarray(seg_masks)
        B, S, D = feats.shape
        assert S == self.num_segment and D == self.D
        assert masks.shape == (B, S)

        # S padded to the bf16 sublane tile (16) so the in-kernel leading-dim
        # reshape stays layout-free; padded segments get mask=0.
        S_pad = _round_up(S, 16)
        if self.batch_tile is not None:
            TB = self.batch_tile
            B_pad = _round_up(B, TB)
            _, _, vmem_limit = _plan_tiles(B, S_pad, D, self.Hp)
        else:
            TB, B_pad, vmem_limit = _plan_tiles(B, S_pad, D, self.Hp)

        return _lgi_forward(
            feats, masks,
            self.k_w_f2a, self.k_w_alpha, self.k_w_fc, self.k_b_fc,
            self.k_w1, self.k_b1, self.k_w2, self.k_b2,
            logic_head=self.logic_head, TB=TB, B_pad=B_pad, S_pad=S_pad,
            vmem_limit=vmem_limit)


def reference_forward(model, feats, masks):
    """Pure-JAX f32 reference mirroring the PyTorch forward (causal=False)."""
    x = feats.astype(jnp.float32)
    a = jnp.tanh(jnp.einsum('bsd,dh->bsh', x, model.w_f2a))
    alpha = jnp.einsum('bsh,h->bs', a, model.w_alpha)
    alpha = jnp.where(masks == 0.0, NEG_INF, alpha)
    attw = jax.nn.softmax(alpha, axis=-1)
    pooled = jnp.einsum('bs,bsd->bd', attw, x)
    emb = pooled @ model.w_fc + model.b_fc
    h = jnp.maximum(emb @ model.w1 + model.b1, 0.0)
    z = h @ model.w2 + model.b2
    return _apply_head(z, model.logic_head), attw


if __name__ == "__main__":
    key = jax.random.PRNGKey(0)
    k_model, k_feat = jax.random.split(key)

    B, seg, D = 2, 8, 32
    model = LGIPredictorPallas(
        visual_hidden_dim=D, grounding_hidden_dim=D, num_segment=seg,
        logic_head="Sigmoid", causal=False, tau=5.0, gamma=0.1, alpha=0.5,
        key=k_model)

    feats = jax.random.normal(k_feat, (B, seg, D), jnp.float32)
    lengths = jnp.array([8, 5], jnp.int32)                 # second video shorter
    masks = (jnp.arange(seg)[None, :] < lengths[:, None]).astype(jnp.float32)

    loc, att_w = model(feats, masks)
    loc, att_w = jax.block_until_ready((loc, att_w))

    loc_ref, attw_ref = reference_forward(model, feats, masks)

    assert loc.shape == (B, 2) and att_w.shape == (B, seg)
    # bf16 feats/weight streaming -> compare against the f32 reference with a
    # correspondingly loosened tolerance (outputs are bf16-input precision).
    assert jnp.allclose(att_w, attw_ref, atol=2e-2, rtol=2e-2)
    assert jnp.allclose(loc, loc_ref, atol=2e-2, rtol=2e-2)
    # masked (invalid) segments must get ~zero attention
    assert float(jnp.max(att_w[1, 5:])) < 1e-6

    print("KERNEL_OK")
</pallas_src>

<mosaic_0001>
module attributes {stable_mosaic.version = 11 : i64} {
  func.func @_lgi_kernel(%arg0: i32, %arg1: memref<8x16x32xbf16, #tpu.memory_space<vmem>>, %arg2: memref<8x16xf32, #tpu.memory_space<vmem>>, %arg3: memref<32x128xbf16, #tpu.memory_space<vmem>>, %arg4: memref<1x1x128xf32, #tpu.memory_space<vmem>>, %arg5: memref<32x32xbf16, #tpu.memory_space<vmem>>, %arg6: memref<1x32xf32, #tpu.memory_space<vmem>>, %arg7: memref<32x32xbf16, #tpu.memory_space<vmem>>, %arg8: memref<1x32xf32, #tpu.memory_space<vmem>>, %arg9: memref<32x128xbf16, #tpu.memory_space<vmem>>, %arg10: memref<1x128xf32, #tpu.memory_space<vmem>>, %arg11: memref<8x16xf32, #tpu.memory_space<vmem>>, %arg12: memref<8x128xf32, #tpu.memory_space<vmem>>) attributes {dimension_semantics = [#tpu.dimension_semantics<parallel>], iteration_bounds = array<i64: 1>, scalar_prefetch = 0 : i64, scratch_operands = 0 : i64, tpu.core_type = #tpu.core_type<tc>, window_params = [{transform_indices = @transform_0, window_bounds = array<i64: 8, 16, 32>}, {transform_indices = @transform_1, window_bounds = array<i64: 8, 16>}, {pipeline_mode = #tpu.pipeline_mode<synchronous>, transform_indices = @transform_2, window_bounds = array<i64: 32, 128>}, {pipeline_mode = #tpu.pipeline_mode<synchronous>, transform_indices = @transform_3, window_bounds = array<i64: 1, 1, 128>}, {pipeline_mode = #tpu.pipeline_mode<synchronous>, transform_indices = @transform_4, window_bounds = array<i64: 32, 32>}, {pipeline_mode = #tpu.pipeline_mode<synchronous>, transform_indices = @transform_5, window_bounds = array<i64: 1, 32>}, {pipeline_mode = #tpu.pipeline_mode<synchronous>, transform_indices = @transform_6, window_bounds = array<i64: 32, 32>}, {pipeline_mode = #tpu.pipeline_mode<synchronous>, transform_indices = @transform_7, window_bounds = array<i64: 1, 32>}, {pipeline_mode = #tpu.pipeline_mode<synchronous>, transform_indices = @transform_8, window_bounds = array<i64: 32, 128>}, {pipeline_mode = #tpu.pipeline_mode<synchronous>, transform_indices = @transform_9, window_bounds = array<i64: 1, 128>}, {transform_indices = @transform_10, window_bounds = array<i64: 8, 16>}, {transform_indices = @transform_11, window_bounds = array<i64: 8, 128>}]} {
    %c0 = arith.constant 0 : index
    %c0_0 = arith.constant 0 : index
    %c0_1 = arith.constant 0 : index
    %0 = vector.load %arg1[%c0, %c0_0, %c0_1] : memref<8x16x32xbf16, #tpu.memory_space<vmem>>, vector<8x16x32xbf16>
    %1 = vector.shape_cast %0 : vector<8x16x32xbf16> to vector<128x32xbf16>
    %c0_2 = arith.constant 0 : index
    %c0_3 = arith.constant 0 : index
    %2 = vector.load %arg3[%c0_2, %c0_3] : memref<32x128xbf16, #tpu.memory_space<vmem>>, vector<32x128xbf16>
    %cst = arith.constant dense<0.000000e+00> : vector<128x128xf32>
    %3 = tpu.matmul %1, %2, %cst {dimension_numbers = #tpu.dot_dimension_numbers<[1], [0], [0], [1], [0, 0, 1, 1], [], []>} : vector<128x32xbf16>, vector<32x128xbf16>, vector<128x128xf32> -> vector<128x128xf32>
    %4 = math.tanh %3 : vector<128x128xf32>
    %5 = vector.shape_cast %4 : vector<128x128xf32> to vector<8x16x128xf32>
    %c0_4 = arith.constant 0 : index
    %c0_5 = arith.constant 0 : index
    %c0_6 = arith.constant 0 : index
    %6 = vector.load %arg4[%c0_4, %c0_5, %c0_6] : memref<1x1x128xf32, #tpu.memory_space<vmem>>, vector<1x1x128xf32>
    %7 = vector.broadcast %6 : vector<1x1x128xf32> to vector<8x16x128xf32>
    %8 = arith.mulf %5, %7 : vector<8x16x128xf32>
    %cst_7 = arith.constant dense<0.000000e+00> : vector<8x16xf32>
    %9 = vector.multi_reduction <add>, %8, %cst_7 [2] : vector<8x16x128xf32> to vector<8x16xf32>
    %c0_8 = arith.constant 0 : index
    %c0_9 = arith.constant 0 : index
    %10 = vector.load %arg2[%c0_8, %c0_9] : memref<8x16xf32, #tpu.memory_space<vmem>>, vector<8x16xf32>
    %cst_10 = arith.constant 0.000000e+00 : f32
    %11 = vector.broadcast %cst_10 : f32 to vector<8x16xf32>
    %12 = arith.cmpf oeq, %10, %11 : vector<8x16xf32>
    %cst_11 = arith.constant -1.000000e+09 : f32
    %13 = vector.broadcast %cst_11 : f32 to vector<8x16xf32>
    %14 = arith.select %12, %13, %9 : vector<8x16xi1>, vector<8x16xf32>
    %cst_12 = arith.constant dense<0xFF800000> : vector<8xf32>
    %15 = vector.multi_reduction <maximumf>, %14, %cst_12 [1] : vector<8x16xf32> to vector<8xf32>
    %16 = vector.shape_cast %15 : vector<8xf32> to vector<8x1xf32>
    %17 = vector.broadcast %16 : vector<8x1xf32> to vector<8x16xf32>
    %18 = arith.subf %14, %17 : vector<8x16xf32>
    %19 = math.exp %18 : vector<8x16xf32>
    %cst_13 = arith.constant dense<0.000000e+00> : vector<8xf32>
    %20 = vector.multi_reduction <add>, %19, %cst_13 [1] : vector<8x16xf32> to vector<8xf32>
    %21 = vector.shape_cast %20 : vector<8xf32> to vector<8x1xf32>
    %22 = vector.broadcast %21 : vector<8x1xf32> to vector<8x16xf32>
    %23 = arith.divf %19, %22 : vector<8x16xf32>
    %c0_14 = arith.constant 0 : index
    %c0_15 = arith.constant 0 : index
    %24 = vector.load %arg11[%c0_14, %c0_15] : memref<8x16xf32, #tpu.memory_space<vmem>>, vector<8x16xf32>
    tpu.vector_store %arg11[%c0_14, %c0_15], %23 {strides = array<i32>} : memref<8x16xf32, #tpu.memory_space<vmem>>, vector<8x16xf32>,
    %25 = arith.extf %0 : vector<8x16x32xbf16> to vector<8x16x32xf32>
    %26 = vector.shape_cast %23 : vector<8x16xf32> to vector<8x16x1xf32>
    %27 = vector.broadcast %26 : vector<8x16x1xf32> to vector<8x16x32xf32>
    %28 = arith.mulf %25, %27 : vector<8x16x32xf32>
    %cst_16 = arith.constant dense<0.000000e+00> : vector<8x32xf32>
    %29 = vector.multi_reduction <add>, %28, %cst_16 [1] : vector<8x16x32xf32> to vector<8x32xf32>
    %30 = arith.truncf %29 : vector<8x32xf32> to vector<8x32xbf16>
    %c0_17 = arith.constant 0 : index
    %c0_18 = arith.constant 0 : index
    %31 = vector.load %arg5[%c0_17, %c0_18] : memref<32x32xbf16, #tpu.memory_space<vmem>>, vector<32x32xbf16>
    %cst_19 = arith.constant dense<0.000000e+00> : vector<8x32xf32>
    %32 = tpu.matmul %30, %31, %cst_19 {dimension_numbers = #tpu.dot_dimension_numbers<[1], [0], [0], [1], [0, 0, 1, 1], [], []>} : vector<8x32xbf16>, vector<32x32xbf16>, vector<8x32xf32> -> vector<8x32xf32>
    %c0_20 = arith.constant 0 : index
    %c0_21 = arith.constant 0 : index
    %33 = vector.load %arg6[%c0_20, %c0_21] : memref<1x32xf32, #tpu.memory_space<vmem>>, vector<1x32xf32>
    %34 = vector.broadcast %33 : vector<1x32xf32> to vector<8x32xf32>
    %35 = arith.addf %32, %34 : vector<8x32xf32>
    %36 = arith.truncf %35 : vector<8x32xf32> to vector<8x32xbf16>
    %c0_22 = arith.constant 0 : index
    %c0_23 = arith.constant 0 : index
    %37 = vector.load %arg7[%c0_22, %c0_23] : memref<32x32xbf16, #tpu.memory_space<vmem>>, vector<32x32xbf16>
    %cst_24 = arith.constant dense<0.000000e+00> : vector<8x32xf32>
    %38 = tpu.matmul %36, %37, %cst_24 {dimension_numbers = #tpu.dot_dimension_numbers<[1], [0], [0], [1], [0, 0, 1, 1], [], []>} : vector<8x32xbf16>, vector<32x32xbf16>, vector<8x32xf32> -> vector<8x32xf32>
    %c0_25 = arith.constant 0 : index
    %c0_26 = arith.constant 0 : index
    %39 = vector.load %arg8[%c0_25, %c0_26] : memref<1x32xf32, #tpu.memory_space<vmem>>, vector<1x32xf32>
    %40 = vector.broadcast %39 : vector<1x32xf32> to vector<8x32xf32>
    %41 = arith.addf %38, %40 : vector<8x32xf32>
    %cst_27 = arith.constant 0.000000e+00 : f32
    %42 = vector.broadcast %cst_27 : f32 to vector<8x32xf32>
    %43 = arith.maximumf %41, %42 : vector<8x32xf32>
    %44 = arith.truncf %43 : vector<8x32xf32> to vector<8x32xbf16>
    %c0_28 = arith.constant 0 : index
    %c0_29 = arith.constant 0 : index
    %45 = vector.load %arg9[%c0_28, %c0_29] : memref<32x128xbf16, #tpu.memory_space<vmem>>, vector<32x128xbf16>
    %cst_30 = arith.constant dense<0.000000e+00> : vector<8x128xf32>
    %46 = tpu.matmul %44, %45, %cst_30 {dimension_numbers = #tpu.dot_dimension_numbers<[1], [0], [0], [1], [0, 0, 1, 1], [], []>} : vector<8x32xbf16>, vector<32x128xbf16>, vector<8x128xf32> -> vector<8x128xf32>
    %c0_31 = arith.constant 0 : index
    %c0_32 = arith.constant 0 : index
    %47 = vector.load %arg10[%c0_31, %c0_32] : memref<1x128xf32, #tpu.memory_space<vmem>>, vector<1x128xf32>
    %48 = vector.broadcast %47 : vector<1x128xf32> to vector<8x128xf32>
    %49 = arith.addf %46, %48 : vector<8x128xf32>
    %50 = arith.negf %49 : vector<8x128xf32>
    %51 = math.exp %50 : vector<8x128xf32>
    %cst_33 = arith.constant 1.000000e+00 : f32
    %52 = vector.broadcast %cst_33 : f32 to vector<8x128xf32>
    %53 = arith.addf %52, %51 : vector<8x128xf32>
    %54 = arith.divf %52, %53 : vector<8x128xf32>
    %c0_34 = arith.constant 0 : index
    %c0_35 = arith.constant 0 : index
    %55 = vector.load %arg12[%c0_34, %c0_35] : memref<8x128xf32, #tpu.memory_space<vmem>>, vector<8x128xf32>
    tpu.vector_store %arg12[%c0_34, %c0_35], %54 {strides = array<i32>} : memref<8x128xf32, #tpu.memory_space<vmem>>, vector<8x128xf32>,
    return
  }
  func.func @transform_0(%arg0: i32) -> (i32, i32, i32) {
    %c0_i32 = arith.constant 0 : i32
    %c0_i32_0 = arith.constant 0 : i32
    %c0_i32_1 = arith.constant 0 : i32
    return %arg0, %c0_i32, %c0_i32_0 : i32, i32, i32
  }
  func.func @transform_1(%arg0: i32) -> (i32, i32) {
    %c0_i32 = arith.constant 0 : i32
    %c0_i32_0 = arith.constant 0 : i32
    return %arg0, %c0_i32 : i32, i32
  }
  func.func @transform_2(%arg0: i32) -> (i32, i32) {
    %c0_i32 = arith.constant 0 : i32
    %c0_i32_0 = arith.constant 0 : i32
    %c0_i32_1 = arith.constant 0 : i32
    return %c0_i32, %c0_i32_0 : i32, i32
  }
  func.func @transform_3(%arg0: i32) -> (i32, i32, i32) {
    %c0_i32 = arith.constant 0 : i32
    %c0_i32_0 = arith.constant 0 : i32
    %c0_i32_1 = arith.constant 0 : i32
    %c0_i32_2 = arith.constant 0 : i32
    return %c0_i32, %c0_i32_0, %c0_i32_1 : i32, i32, i32
  }
  func.func @transform_4(%arg0: i32) -> (i32, i32) {
    %c0_i32 = arith.constant 0 : i32
    %c0_i32_0 = arith.constant 0 : i32
    %c0_i32_1 = arith.constant 0 : i32
    return %c0_i32, %c0_i32_0 : i32, i32
  }
  func.func @transform_5(%arg0: i32) -> (i32, i32) {
    %c0_i32 = arith.constant 0 : i32
    %c0_i32_0 = arith.constant 0 : i32
    %c0_i32_1 = arith.constant 0 : i32
    return %c0_i32, %c0_i32_0 : i32, i32
  }
  func.func @transform_6(%arg0: i32) -> (i32, i32) {
    %c0_i32 = arith.constant 0 : i32
    %c0_i32_0 = arith.constant 0 : i32
    %c0_i32_1 = arith.constant 0 : i32
    return %c0_i32, %c0_i32_0 : i32, i32
  }
  func.func @transform_7(%arg0: i32) -> (i32, i32) {
    %c0_i32 = arith.constant 0 : i32
    %c0_i32_0 = arith.constant 0 : i32
    %c0_i32_1 = arith.constant 0 : i32
    return %c0_i32, %c0_i32_0 : i32, i32
  }
  func.func @transform_8(%arg0: i32) -> (i32, i32) {
    %c0_i32 = arith.constant 0 : i32
    %c0_i32_0 = arith.constant 0 : i32
    %c0_i32_1 = arith.constant 0 : i32
    return %c0_i32, %c0_i32_0 : i32, i32
  }
  func.func @transform_9(%arg0: i32) -> (i32, i32) {
    %c0_i32 = arith.constant 0 : i32
    %c0_i32_0 = arith.constant 0 : i32
    %c0_i32_1 = arith.constant 0 : i32
    return %c0_i32, %c0_i32_0 : i32, i32
  }
  func.func @transform_10(%arg0: i32) -> (i32, i32) {
    %c0_i32 = arith.constant 0 : i32
    %c0_i32_0 = arith.constant 0 : i32
    return %arg0, %c0_i32 : i32, i32
  }
  func.func @transform_11(%arg0: i32) -> (i32, i32) {
    %c0_i32 = arith.constant 0 : i32
    %c0_i32_0 = arith.constant 0 : i32
    return %arg0, %c0_i32 : i32, i32
  }
}

</mosaic_0001>

<llo_original>
// kernel: _lgi_forward.1
$region0: #{_lgi_forward.1}
  #allocation0 [shape = 'u32[]', space=smem, size = 0x4, offset = 0x4, fixed_abs, tag = 'smem constant byte address 0x4 - core index']
  #allocation1 [shape = 'u32[72,128]{1,0:T(1,128)}', space=vmem, size = 0x9000, scoped, tag = 'internal scratch']
  %s0 = inlined_call_operand.vmem [shape: bf16[8,16,32], index: 0, kind: input, shape index: {}]
  %s1 = inlined_call_operand.vmem [shape: f32[8,16], index: 1, kind: input, shape index: {}]
  %s2 = inlined_call_operand.vmem [shape: bf16[32,128], index: 2, kind: input, shape index: {}]
  %s3 = inlined_call_operand.vmem [shape: f32[1,1,128], index: 3, kind: input, shape index: {}]
  %s4 = inlined_call_operand.vmem [shape: bf16[32,32], index: 4, kind: input, shape index: {}]
  %s5 = inlined_call_operand.vmem [shape: f32[1,32], index: 5, kind: input, shape index: {}]
  %s6 = inlined_call_operand.vmem [shape: bf16[32,32], index: 6, kind: input, shape index: {}]
  %s7 = inlined_call_operand.vmem [shape: f32[1,32], index: 7, kind: input, shape index: {}]
  %s8 = inlined_call_operand.vmem [shape: bf16[32,128], index: 8, kind: input, shape index: {}]
  %s9 = inlined_call_operand.vmem [shape: f32[1,128], index: 9, kind: input, shape index: {}]
  %s10 = inlined_call_operand.vmem [shape: f32[8,16], index: 10, kind: output, shape index: {0}]
  %s11 = inlined_call_operand.vmem [shape: f32[8,128], index: 11, kind: output, shape index: {1}]
  %12 = xla_tuple %s10, %s11
  %s13 = sld [smem:[#allocation0]]
  $region58: #{_lgi_forward.1} parent=0
    _
  %s15 = ssub.s32 1, %s13
  %s16 = scalar_select 0, %s15, %s13
  // Predicated region
  $region2: #{_lgi_forward.1} parent=0 // pred_check
    _
  $region3: #{_lgi_forward.1} parent=0 // pred_check_branch
    %18 = sbr.rel (0) target = $region5
  $region4: #{_lgi_forward.1} parent=0 // pred_region
    _
  $region5: #{_lgi_forward.1} parent=0 // pred_fallthru
    _
  // Predicated region
  $region6: #{_lgi_forward.1} parent=0 // pred_check
    _
  $region7: #{_lgi_forward.1} parent=0 // pred_check_branch
    %20 = sbr.rel (0) target = $region9
  $region8: #{_lgi_forward.1} parent=0 // pred_region
    _
  $region9: #{_lgi_forward.1} parent=0 // pred_fallthru
    _
  // Predicated region
  $region10: #{_lgi_forward.1} parent=0 // pred_check
    _
  $region11: #{_lgi_forward.1} parent=0 // pred_check_branch
    %22 = sbr.rel (0) target = $region13
  $region12: #{_lgi_forward.1} parent=0 // pred_region
    _
  $region13: #{_lgi_forward.1} parent=0 // pred_fallthru
    _
  // Predicated region
  $region14: #{_lgi_forward.1} parent=0 // pred_check
    _
  $region15: #{_lgi_forward.1} parent=0 // pred_check_branch
    %24 = sbr.rel (0) target = $region17
  $region16: #{_lgi_forward.1} parent=0 // pred_region
    _
  $region17: #{_lgi_forward.1} parent=0 // pred_fallthru
    _
  // Predicated region
  $region18: #{_lgi_forward.1} parent=0 // pred_check
    _
  $region19: #{_lgi_forward.1} parent=0 // pred_check_branch
    %26 = sbr.rel (0) target = $region21
  $region20: #{_lgi_forward.1} parent=0 // pred_region
    _
  $region21: #{_lgi_forward.1} parent=0 // pred_fallthru
    _
  // Predicated region
  $region22: #{_lgi_forward.1} parent=0 // pred_check
    _
  $region23: #{_lgi_forward.1} parent=0 // pred_check_branch
    %28 = sbr.rel (0) target = $region25
  $region24: #{_lgi_forward.1} parent=0 // pred_region
    _
  $region25: #{_lgi_forward.1} parent=0 // pred_fallthru
    _
  // Predicated region
  $region26: #{_lgi_forward.1} parent=0 // pred_check
    _
  $region27: #{_lgi_forward.1} parent=0 // pred_check_branch
    %30 = sbr.rel (0) target = $region29
  $region28: #{_lgi_forward.1} parent=0 // pred_region
    _
  $region29: #{_lgi_forward.1} parent=0 // pred_fallthru
    _
  // Predicated region
  $region30: #{_lgi_forward.1} parent=0 // pred_check
    _
  $region31: #{_lgi_forward.1} parent=0 // pred_check_branch
    %32 = sbr.rel (0) target = $region33
  $region32: #{_lgi_forward.1} parent=0 // pred_region
    _
  $region33: #{_lgi_forward.1} parent=0 // pred_fallthru
    _
  // Predicated region
  $region34: #{_lgi_forward.1} parent=0 // pred_check
    _
  $region35: #{_lgi_forward.1} parent=0 // pred_check_branch
    %34 = sbr.rel (0) target = $region37
  $region36: #{_lgi_forward.1} parent=0 // pred_region
    _
  $region37: #{_lgi_forward.1} parent=0 // pred_fallthru
    _
  // Predicated region
  $region38: #{_lgi_forward.1} parent=0 // pred_check
    _
  $region39: #{_lgi_forward.1} parent=0 // pred_check_branch
    %36 = sbr.rel (0) target = $region41
  $region40: #{_lgi_forward.1} parent=0 // pred_region
    _
  $region41: #{_lgi_forward.1} parent=0 // pred_fallthru
    _
  %v38 = vld [vmem:[%s0] sm:$0xf]
  %v39 = vld [vmem:[%s0 + $0x4] sm:$0xf]
  %v40 = vld [vmem:[%s0 + $0x8] sm:$0xf]
  %v41 = vld [vmem:[%s0 + $0xc] sm:$0xf]
  %v42 = vld [vmem:[%s0 + $0x10] sm:$0xf]
  %v43 = vld [vmem:[%s0 + $0x14] sm:$0xf]
  %v44 = vld [vmem:[%s0 + $0x18] sm:$0xf]
  %v45 = vld [vmem:[%s0 + $0x1c] sm:$0xf]
  %v46 = vld [vmem:[%s0 + $0x20] sm:$0xf]
  %v47 = vld [vmem:[%s0 + $0x24] sm:$0xf]
  %v48 = vld [vmem:[%s0 + $0x28] sm:$0xf]
  %v49 = vld [vmem:[%s0 + $0x2c] sm:$0xf]
  %v50 = vld [vmem:[%s0 + $0x30] sm:$0xf]
  %v51 = vld [vmem:[%s0 + $0x34] sm:$0xf]
  %v52 = vld [vmem:[%s0 + $0x38] sm:$0xf]
  %v53 = vld [vmem:[%s0 + $0x3c] sm:$0xf]
  %v54 = vld [vmem:[%s2] sm:$0xf]
  %v55 = vld [vmem:[%s2 + $0x4] sm:$0xf]
  %v56 = vld [vmem:[%s2 + $0x8] sm:$0xf]
  %v57 = vld [vmem:[%s2 + $0xc] sm:$0xf]
  %v74 = vunpack.c.l.b16 %v38
  %v75 = vunpack.c.l.b16 %v39
  %v76 = vunpack.c.l.b16 %v40
  %v77 = vunpack.c.l.b16 %v41
  %v78 = vunpack.c.l.b16 %v42
  %v79 = vunpack.c.l.b16 %v43
  %v80 = vunpack.c.l.b16 %v44
  %v81 = vunpack.c.l.b16 %v45
  %v82 = vunpack.c.l.b16 %v46
  %v83 = vunpack.c.l.b16 %v47
  %v84 = vunpack.c.l.b16 %v48
  %v85 = vunpack.c.l.b16 %v49
  %v86 = vunpack.c.l.b16 %v50
  %v87 = vunpack.c.l.b16 %v51
  %v88 = vunpack.c.l.b16 %v52
  %v89 = vunpack.c.l.b16 %v53
  %v90 = vpack.c.b16 %v75, %v74
  %v91 = vpack.c.b16 %v77, %v76
  %v92 = vpack.c.b16 %v79, %v78
  %v93 = vpack.c.b16 %v81, %v80
  %v94 = vpack.c.b16 %v83, %v82
  %v95 = vpack.c.b16 %v85, %v84
  %v96 = vpack.c.b16 %v87, %v86
  %v97 = vpack.c.b16 %v89, %v88
  %v102 = vunpack.c.l.b16 %v54
  %v103 = vunpack.c.l.b16 %v55
  %v104 = vunpack.c.l.b16 %v56
  %v105 = vunpack.c.l.b16 %v57
  %v106 = vpack.c.b16 %v103, %v102
  %v107 = vpack.c.b16 %v105, %v104
  %vm110 = vcmask 261120
  %v112 = vsel %vm110, %v90, 0
  %v115 = vsel %vm110, %v91, 0
  %v118 = vsel %vm110, %v92, 0
  %v121 = vsel %vm110, %v93, 0
  %v124 = vsel %vm110, %v94, 0
  %v127 = vsel %vm110, %v95, 0
  %v130 = vsel %vm110, %v96, 0
  %v133 = vsel %vm110, %v97, 0
  %135 = vmatpush.bf16.msra.mxu0 0
  %136 = vmatpush.bf16.msra.mxu0 0
  %137 = vmatpush.bf16.msra.mxu0 0
  %138 = vmatpush.bf16.msra.mxu0 0
  %139 = vmatpush.bf16.msra.mxu0 0
  %140 = vmatpush.bf16.msra.mxu0 0
  %141 = vmatpush.bf16.msra.mxu0 %v107
  %142 = vmatpush.bf16.msra.mxu0 %v106
  %143 = vmatmul.bf16.gmra.mxu0 %v112
  %v144 = vpop.f32.mrf.mxu0
  %v145 = vadd.f32 0.0, %v144
  %v146 = vpop.f32.mrf.mxu0
  %v147 = vadd.f32 0.0, %v146
  %148 = vmatmul.bf16.gmra.mxu0 %v115
  %v149 = vpop.f32.mrf.mxu0
  %v150 = vadd.f32 0.0, %v149
  %v151 = vpop.f32.mrf.mxu0
  %v152 = vadd.f32 0.0, %v151
  %153 = vmatmul.bf16.gmra.mxu0 %v118
  %v154 = vpop.f32.mrf.mxu0
  %v155 = vadd.f32 0.0, %v154
  %v156 = vpop.f32.mrf.mxu0
  %v157 = vadd.f32 0.0, %v156
  %158 = vmatmul.bf16.gmra.mxu0 %v121
  %v159 = vpop.f32.mrf.mxu0
  %v160 = vadd.f32 0.0, %v159
  %v161 = vpop.f32.mrf.mxu0
  %v162 = vadd.f32 0.0, %v161
  %163 = vmatmul.bf16.gmra.mxu0 %v124
  %v164 = vpop.f32.mrf.mxu0
  %v165 = vadd.f32 0.0, %v164
  %v166 = vpop.f32.mrf.mxu0
  %v167 = vadd.f32 0.0, %v166
  %168 = vmatmul.bf16.gmra.mxu0 %v127
  %v169 = vpop.f32.mrf.mxu0
  %v170 = vadd.f32 0.0, %v169
  %v171 = vpop.f32.mrf.mxu0
  %v172 = vadd.f32 0.0, %v171
  %173 = vmatmul.bf16.gmra.mxu0 %v130
  %v174 = vpop.f32.mrf.mxu0
  %v175 = vadd.f32 0.0, %v174
  %v176 = vpop.f32.mrf.mxu0
  %v177 = vadd.f32 0.0, %v176
  %178 = vmatmul.bf16.gmra.mxu0 %v133
  %v179 = vpop.f32.mrf.mxu0
  %v180 = vadd.f32 0.0, %v179
  %v181 = vpop.f32.mrf.mxu0
  %v182 = vadd.f32 0.0, %v181
  %183 = vdwg.mxu0
  %v184 = vtanh.pop %v145
  %v185 = vtanh.pop %v147
  %v186 = vtanh.pop %v150
  %v187 = vtanh.pop %v152
  %v188 = vtanh.pop %v155
  %v189 = vtanh.pop %v157
  %v190 = vtanh.pop %v160
  %v191 = vtanh.pop %v162
  %v192 = vtanh.pop %v165
  %v193 = vtanh.pop %v167
  %v194 = vtanh.pop %v170
  %v195 = vtanh.pop %v172
  %v196 = vtanh.pop %v175
  %v197 = vtanh.pop %v177
  %v198 = vtanh.pop %v180
  %v199 = vtanh.pop %v182
  %v200 = vld [vmem:[%s3] sm:$0x1]
  %v202 = vperm.slane %v200, 0
  %v204 = vmul.f32 %v184, %v202
  %v205 = vmul.f32 %v185, %v202
  %v206 = vmul.f32 %v186, %v202
  %v207 = vmul.f32 %v187, %v202
  %v208 = vmul.f32 %v188, %v202
  %v209 = vmul.f32 %v189, %v202
  %v210 = vmul.f32 %v190, %v202
  %v211 = vmul.f32 %v191, %v202
  %v212 = vmul.f32 %v192, %v202
  %v213 = vmul.f32 %v193, %v202
  %v214 = vmul.f32 %v194, %v202
  %v215 = vmul.f32 %v195, %v202
  %v216 = vmul.f32 %v196, %v202
  %v217 = vmul.f32 %v197, %v202
  %v218 = vmul.f32 %v198, %v202
  %v219 = vmul.f32 %v199, %v202
  %220 = vadd.xlane.f32.xlu0 %v204
  %v221 = vpop.xlane.xlu0 %220
  %222 = vadd.xlane.f32.xlu0 %v205
  %v223 = vpop.xlane.xlu0 %222
  %224 = vadd.xlane.f32.xlu0 %v206
  %v225 = vpop.xlane.xlu0 %224
  %226 = vadd.xlane.f32.xlu0 %v207
  %v227 = vpop.xlane.xlu0 %226
  %228 = vadd.xlane.f32.xlu0 %v208
  %v229 = vpop.xlane.xlu0 %228
  %230 = vadd.xlane.f32.xlu0 %v209
  %v231 = vpop.xlane.xlu0 %230
  %232 = vadd.xlane.f32.xlu0 %v210
  %v233 = vpop.xlane.xlu0 %232
  %234 = vadd.xlane.f32.xlu0 %v211
  %v235 = vpop.xlane.xlu0 %234
  %236 = vadd.xlane.f32.xlu0 %v212
  %v237 = vpop.xlane.xlu0 %236
  %238 = vadd.xlane.f32.xlu0 %v213
  %v239 = vpop.xlane.xlu0 %238
  %240 = vadd.xlane.f32.xlu0 %v214
  %v241 = vpop.xlane.xlu0 %240
  %242 = vadd.xlane.f32.xlu0 %v215
  %v243 = vpop.xlane.xlu0 %242
  %244 = vadd.xlane.f32.xlu0 %v216
  %v245 = vpop.xlane.xlu0 %244
  %246 = vadd.xlane.f32.xlu0 %v217
  %v247 = vpop.xlane.xlu0 %246
  %248 = vadd.xlane.f32.xlu0 %v218
  %v249 = vpop.xlane.xlu0 %248
  %250 = vadd.xlane.f32.xlu0 %v219
  %v251 = vpop.xlane.xlu0 %250
  %v252 = vld [vmem:[%s1] sm:$0xff]
  %vm253 = vcmp.eq.f32.partialorder %v252, 0.0
  %v270 = vlaneseq
  %v271 = vand.u32 %v270, 127
  %v272 = vperm.slane %v221, %v271
  %v273 = vadd.s32 %v271, 4294967288
  %v274 = vperm.slane %v223, %v273
  %vm275 = vcmask 130112
  %v276 = vsel %vm275, %v274, %v272
  %v277 = vperm.slane %v225, %v271
  %v278 = vperm.slane %v227, %v273
  %v279 = vsel %vm275, %v278, %v277
  %v280 = vperm.slane %v229, %v271
  %v281 = vperm.slane %v231, %v273
  %v282 = vsel %vm275, %v281, %v280
  %v283 = vperm.slane %v233, %v271
  %v284 = vperm.slane %v235, %v273
  %v285 = vsel %vm275, %v284, %v283
  %v286 = vperm.slane %v237, %v271
  %v287 = vperm.slane %v239, %v273
  %v288 = vsel %vm275, %v287, %v286
  %v289 = vperm.slane %v241, %v271
  %v290 = vperm.slane %v243, %v273
  %v291 = vsel %vm275, %v290, %v289
  %v292 = vperm.slane %v245, %v271
  %v293 = vperm.slane %v247, %v273
  %v294 = vsel %vm275, %v293, %v292
  %v295 = vperm.slane %v249, %v271
  %v296 = vperm.slane %v251, %v273
  %v297 = vsel %vm275, %v296, %v295
  %vm298 = vcmask 1041409
  %v299 = vsel %vm298, %v279, %v276
  %vm300 = vcmask 1042434
  %v301 = vsel %vm300, %v282, %v299
  %vm302 = vcmask 1043459
  %v303 = vsel %vm302, %v285, %v301
  %vm304 = vcmask 1044484
  %v305 = vsel %vm304, %v288, %v303
  %vm306 = vcmask 1045509
  %v307 = vsel %vm306, %v291, %v305
  %vm308 = vcmask 1046534
  %v309 = vsel %vm308, %v294, %v307
  %vm310 = vcmask 1047559
  %v311 = vsel %vm310, %v297, %v309
  %v313 = vsel %vm253, -1e+09, %v311
  %vm314 = vcmask 130048
  %v315 = vsel %vm314, %v313, -inf
  %316 = vmax.xlane.f32.xlu0 %v315
  %v317 = vpop.xlane.xlu0 %316
  %v318 = vsub.f32 %v313, %v317
  %v319 = vmul.f32 %v318, 1.442695
  %v320 = vpow.pop %v319
  %v321 = vsel %vm314, %v320, 0.0
  %322 = vadd.xlane.f32.xlu0 %v321
  %v323 = vpop.xlane.xlu0 %322
  %v324 = vrcp.pop %v323
  %v325 = vmul.f32 %v323, %v324
  %v326 = vsub.f32 1.0, %v325
  %v327 = vmul.f32 %v324, %v326
  %v328 = vadd.f32 %v324, %v327
  %vm329 = vweird.f32 %v323
  %vm330 = vweird.f32 %v324
  %vm331 = vmor %vm329, %vm330
  %v332 = vsel %vm331, %v324, %v328
  %v333 = vand.u32 2147483647, %v323
  %vm334 = vcmp.eq.f32.partialorder %v333, 8.507059e+37
  %v335 = vand.u32 %v323, 2147483648
  %v336 = vor.u32 1.1754944e-38, %v335
  %v337 = vsel %vm334, %v336, %v332
  %v338 = vmul.f32 %v320, %v337
  %339 = vst.msk [vmem:[%s10] sm:$0xff] %vm314, %v338
  %v340 = vunpack.c.l.bf16 %v38
  %v341 = vunpack.c.l.bf16 %v39
  %v342 = vunpack.c.l.bf16 %v40
  %v343 = vunpack.c.l.bf16 %v41
  %v344 = vunpack.c.l.bf16 %v42
  %v345 = vunpack.c.l.bf16 %v43
  %v346 = vunpack.c.l.bf16 %v44
  %v347 = vunpack.c.l.bf16 %v45
  %v348 = vunpack.c.l.bf16 %v46
  %v349 = vunpack.c.l.bf16 %v47
  %v350 = vunpack.c.l.bf16 %v48
  %v351 = vunpack.c.l.bf16 %v49
  %v352 = vunpack.c.l.bf16 %v50
  %v353 = vunpack.c.l.bf16 %v51
  %v354 = vunpack.c.l.bf16 %v52
  %v355 = vunpack.c.l.bf16 %v53
  %v356 = vperm.slane %v338, 0
  %v357 = vlaneseq
  %v358 = vshrl.u32 %v357, 7
  %360 = vset.pattern.permute.xlu0 %v358
  %361 = vperm.xlu0 %360, %v356
  %v362 = vpop.permute.xlu0 %361
  %v363 = vlaneseq
  %v364 = vshrl.u32 %v363, 7
  %v365 = vadd.s32 %v364, 8
  %366 = vset.pattern.permute.xlu0 %v365
  %367 = vperm.xlu0 %366, %v356
  %v368 = vpop.permute.xlu0 %367
  %v369 = vperm.slane %v338, 1
  %v370 = vlaneseq
  %v371 = vshrl.u32 %v370, 7
  %373 = vset.pattern.permute.xlu0 %v371
  %374 = vperm.xlu0 %373, %v369
  %v375 = vpop.permute.xlu0 %374
  %v376 = vlaneseq
  %v377 = vshrl.u32 %v376, 7
  %v378 = vadd.s32 %v377, 8
  %379 = vset.pattern.permute.xlu0 %v378
  %380 = vperm.xlu0 %379, %v369
  %v381 = vpop.permute.xlu0 %380
  %v382 = vperm.slane %v338, 2
  %v383 = vlaneseq
  %v384 = vshrl.u32 %v383, 7
  %386 = vset.pattern.permute.xlu0 %v384
  %387 = vperm.xlu0 %386, %v382
  %v388 = vpop.permute.xlu0 %387
  %v389 = vlaneseq
  %v390 = vshrl.u32 %v389, 7
  %v391 = vadd.s32 %v390, 8
  %392 = vset.pattern.permute.xlu0 %v391
  %393 = vperm.xlu0 %392, %v382
  %v394 = vpop.permute.xlu0 %393
  %v395 = vperm.slane %v338, 3
  %v396 = vlaneseq
  %v397 = vshrl.u32 %v396, 7
  %399 = vset.pattern.permute.xlu0 %v397
  %400 = vperm.xlu0 %399, %v395
  %v401 = vpop.permute.xlu0 %400
  %v402 = vlaneseq
  %v403 = vshrl.u32 %v402, 7
  %v404 = vadd.s32 %v403, 8
  %405 = vset.pattern.permute.xlu0 %v404
  %406 = vperm.xlu0 %405, %v395
  %v407 = vpop.permute.xlu0 %406
  %v408 = vperm.slane %v338, 4
  %v409 = vlaneseq
  %v410 = vshrl.u32 %v409, 7
  %412 = vset.pattern.permute.xlu0 %v410
  %413 = vperm.xlu0 %412, %v408
  %v414 = vpop.permute.xlu0 %413
  %v415 = vlaneseq
  %v416 = vshrl.u32 %v415, 7
  %v417 = vadd.s32 %v416, 8
  %418 = vset.pattern.permute.xlu0 %v417
  %419 = vperm.xlu0 %418, %v408
  %v420 = vpop.permute.xlu0 %419
  %v421 = vperm.slane %v338, 5
  %v422 = vlaneseq
  %v423 = vshrl.u32 %v422, 7
  %425 = vset.pattern.permute.xlu0 %v423
  %426 = vperm.xlu0 %425, %v421
  %v427 = vpop.permute.xlu0 %426
  %v428 = vlaneseq
  %v429 = vshrl.u32 %v428, 7
  %v430 = vadd.s32 %v429, 8
  %431 = vset.pattern.permute.xlu0 %v430
  %432 = vperm.xlu0 %431, %v421
  %v433 = vpop.permute.xlu0 %432
  %v434 = vperm.slane %v338, 6
  %v435 = vlaneseq
  %v436 = vshrl.u32 %v435, 7
  %438 = vset.pattern.permute.xlu0 %v436
  %439 = vperm.xlu0 %438, %v434
  %v440 = vpop.permute.xlu0 %439
  %v441 = vlaneseq
  %v442 = vshrl.u32 %v441, 7
  %v443 = vadd.s32 %v442, 8
  %444 = vset.pattern.permute.xlu0 %v443
  %445 = vperm.xlu0 %444, %v434
  %v446 = vpop.permute.xlu0 %445
  %v447 = vperm.slane %v338, 7
  %v448 = vlaneseq
  %v449 = vshrl.u32 %v448, 7
  %451 = vset.pattern.permute.xlu0 %v449
  %452 = vperm.xlu0 %451, %v447
  %v453 = vpop.permute.xlu0 %452
  %v454 = vlaneseq
  %v455 = vshrl.u32 %v454, 7
  %v456 = vadd.s32 %v455, 8
  %457 = vset.pattern.permute.xlu0 %v456
  %458 = vperm.xlu0 %457, %v447
  %v459 = vpop.permute.xlu0 %458
  %v460 = vmul.f32 %v340, %v362
  %v461 = vmul.f32 %v341, %v368
  %v462 = vmul.f32 %v342, %v375
  %v463 = vmul.f32 %v343, %v381
  %v464 = vmul.f32 %v344, %v388
  %v465 = vmul.f32 %v345, %v394
  %v466 = vmul.f32 %v346, %v401
  %v467 = vmul.f32 %v347, %v407
  %v468 = vmul.f32 %v348, %v414
  %v469 = vmul.f32 %v349, %v420
  %v470 = vmul.f32 %v350, %v427
  %v471 = vmul.f32 %v351, %v433
  %v472 = vmul.f32 %v352, %v440
  %v473 = vmul.f32 %v353, %v446
  %v474 = vmul.f32 %v354, %v453
  %v475 = vmul.f32 %v355, %v459
  %v476 = vsel %vm110, %v460, 0.0
  %v477 = vsel %vm110, %v461, 0.0
  %v478 = vadd.f32 %v476, %v477
  %v479 = vrot.slane %v478, 4
  %v480 = vadd.f32 %v478, %v479
  %v481 = vrot.slane %v480, 2
  %v482 = vadd.f32 %v480, %v481
  %v483 = vrot.slane %v482, 1
  %v484 = vadd.f32 %v482, %v483
  %v485 = vsel %vm110, %v462, 0.0
  %v486 = vsel %vm110, %v463, 0.0
  %v487 = vadd.f32 %v485, %v486
  %v488 = vrot.slane %v487, 4
  %v489 = vadd.f32 %v487, %v488
  %v490 = vrot.slane %v489, 2
  %v491 = vadd.f32 %v489, %v490
  %v492 = vrot.slane %v491, 1
  %v493 = vadd.f32 %v491, %v492
  %v494 = vsel %vm110, %v464, 0.0
  %v495 = vsel %vm110, %v465, 0.0
  %v496 = vadd.f32 %v494, %v495
  %v497 = vrot.slane %v496, 4
  %v498 = vadd.f32 %v496, %v497
  %v499 = vrot.slane %v498, 2
  %v500 = vadd.f32 %v498, %v499
  %v501 = vrot.slane %v500, 1
  %v502 = vadd.f32 %v500, %v501
  %v503 = vsel %vm110, %v466, 0.0
  %v504 = vsel %vm110, %v467, 0.0
  %v505 = vadd.f32 %v503, %v504
  %v506 = vrot.slane %v505, 4
  %v507 = vadd.f32 %v505, %v506
  %v508 = vrot.slane %v507, 2
  %v509 = vadd.f32 %v507, %v508
  %v510 = vrot.slane %v509, 1
  %v511 = vadd.f32 %v509, %v510
  %v512 = vsel %vm110, %v468, 0.0
  %v513 = vsel %vm110, %v469, 0.0
  %v514 = vadd.f32 %v512, %v513
  %v515 = vrot.slane %v514, 4
  %v516 = vadd.f32 %v514, %v515
  %v517 = vrot.slane %v516, 2
  %v518 = vadd.f32 %v516, %v517
  %v519 = vrot.slane %v518, 1
  %v520 = vadd.f32 %v518, %v519
  %v521 = vsel %vm110, %v470, 0.0
  %v522 = vsel %vm110, %v471, 0.0
  %v523 = vadd.f32 %v521, %v522
  %v524 = vrot.slane %v523, 4
  %v525 = vadd.f32 %v523, %v524
  %v526 = vrot.slane %v525, 2
  %v527 = vadd.f32 %v525, %v526
  %v528 = vrot.slane %v527, 1
  %v529 = vadd.f32 %v527, %v528
  %v530 = vsel %vm110, %v472, 0.0
  %v531 = vsel %vm110, %v473, 0.0
  %v532 = vadd.f32 %v530, %v531
  %v533 = vrot.slane %v532, 4
  %v534 = vadd.f32 %v532, %v533
  %v535 = vrot.slane %v534, 2
  %v536 = vadd.f32 %v534, %v535
  %v537 = vrot.slane %v536, 1
  %v538 = vadd.f32 %v536, %v537
  %v539 = vsel %vm110, %v474, 0.0
  %v540 = vsel %vm110, %v475, 0.0
  %v541 = vadd.f32 %v539, %v540
  %v542 = vrot.slane %v541, 4
  %v543 = vadd.f32 %v541, %v542
  %v544 = vrot.slane %v543, 2
  %v545 = vadd.f32 %v543, %v544
  %v546 = vrot.slane %v545, 1
  %v547 = vadd.f32 %v545, %v546
  %v548 = vpack.c.bf16 %v484, %v484
  %v549 = vpack.c.bf16 %v493, %v493
  %v550 = vpack.c.bf16 %v502, %v502
  %v551 = vpack.c.bf16 %v511, %v511
  %v552 = vpack.c.bf16 %v520, %v520
  %v553 = vpack.c.bf16 %v529, %v529
  %v554 = vpack.c.bf16 %v538, %v538
  %v555 = vpack.c.bf16 %v547, %v547
  %v556 = vld [vmem:[%s4] sm:$0xf]
  %v557 = vld [vmem:[%s4 + $0x4] sm:$0xf]
  %v558 = vld [vmem:[%s4 + $0x8] sm:$0xf]
  %v559 = vld [vmem:[%s4 + $0xc] sm:$0xf]
  %v560 = vld [vmem:[%s5] sm:$0x1]
  %v562 = vperm.slane %v560, 0
  %v572 = vunpack.c.l.b16 %v548
  %v573 = vunpack.c.l.b16 %v549
  %v574 = vunpack.c.l.b16 %v550
  %v575 = vunpack.c.l.b16 %v551
  %v576 = vunpack.c.l.b16 %v552
  %v577 = vunpack.c.l.b16 %v553
  %v578 = vunpack.c.l.b16 %v554
  %v579 = vunpack.c.l.b16 %v555
  %v580 = vsel %vm298, %v573, %v572
  %v581 = vsel %vm300, %v574, %v580
  %v582 = vsel %vm302, %v575, %v581
  %v583 = vsel %vm304, %v576, %v582
  %v584 = vsel %vm306, %v577, %v583
  %v585 = vsel %vm308, %v578, %v584
  %v586 = vsel %vm310, %v579, %v585
  %v587 = vpack.c.b16 %v586, %v586
  %v592 = vunpack.c.l.b16 %v556
  %v593 = vunpack.c.l.b16 %v557
  %v594 = vunpack.c.l.b16 %v558
  %v595 = vunpack.c.l.b16 %v559
  %v596 = vpack.c.b16 %v593, %v592
  %v597 = vpack.c.b16 %v595, %v594
  %v601 = vsel %vm110, %v587, 0
  %603 = vmatpush.bf16.msra.mxu0 0
  %604 = vmatpush.bf16.msra.mxu0 0
  %605 = vmatpush.bf16.msra.mxu0 0
  %606 = vmatpush.bf16.msra.mxu0 0
  %607 = vmatpush.bf16.msra.mxu0 0
  %608 = vmatpush.bf16.msra.mxu0 0
  %609 = vmatpush.bf16.msra.mxu0 %v597
  %610 = vmatpush.bf16.msra.mxu0 %v596
  %611 = vmatmul.bf16.gmra.mxu0 %v601
  %v612 = vpop.f32.mrf.mxu0
  %v613 = vadd.f32 %v562, %v612
  %v614 = vpop.f32.mrf.mxu0
  %615 = vdwg.mxu0
  %v616 = vpack.c.bf16 %v613, %v613
  %v617 = vld [vmem:[%s6] sm:$0xf]
  %v618 = vld [vmem:[%s6 + $0x4] sm:$0xf]
  %v619 = vld [vmem:[%s6 + $0x8] sm:$0xf]
  %v620 = vld [vmem:[%s6 + $0xc] sm:$0xf]
  %v621 = vld [vmem:[%s7] sm:$0x1]
  %v623 = vperm.slane %v621, 0
  %v629 = vunpack.c.l.b16 %v617
  %v630 = vunpack.c.l.b16 %v618
  %v631 = vunpack.c.l.b16 %v619
  %v632 = vunpack.c.l.b16 %v620
  %v633 = vpack.c.b16 %v630, %v629
  %v634 = vpack.c.b16 %v632, %v631
  %v638 = vsel %vm110, %v616, 0
  %640 = vmatpush.bf16.msra.mxu0 0
  %641 = vmatpush.bf16.msra.mxu0 0
  %642 = vmatpush.bf16.msra.mxu0 0
  %643 = vmatpush.bf16.msra.mxu0 0
  %644 = vmatpush.bf16.msra.mxu0 0
  %645 = vmatpush.bf16.msra.mxu0 0
  %646 = vmatpush.bf16.msra.mxu0 %v634
  %647 = vmatpush.bf16.msra.mxu0 %v633
  %648 = vmatmul.bf16.gmra.mxu0 %v638
  %v649 = vpop.f32.mrf.mxu0
  %v650 = vadd.f32 %v623, %v649
  %v651 = vpop.f32.mrf.mxu0
  %652 = vdwg.mxu0
  %v653 = vmax.f32 %v650, 0.0
  %v654 = vpack.c.bf16 %v653, %v653
  %v655 = vld [vmem:[%s8] sm:$0xf]
  %v656 = vld [vmem:[%s8 + $0x4] sm:$0xf]
  %v657 = vld [vmem:[%s8 + $0x8] sm:$0xf]
  %v658 = vld [vmem:[%s8 + $0xc] sm:$0xf]
  %v659 = vld [vmem:[%s9] sm:$0x1]
  %v661 = vperm.slane %v659, 0
  %v667 = vunpack.c.l.b16 %v655
  %v668 = vunpack.c.l.b16 %v656
  %v669 = vunpack.c.l.b16 %v657
  %v670 = vunpack.c.l.b16 %v658
  %v671 = vpack.c.b16 %v668, %v667
  %v672 = vpack.c.b16 %v670, %v669
  %v676 = vsel %vm110, %v654, 0
  %678 = vmatpush.bf16.msra.mxu0 0
  %679 = vmatpush.bf16.msra.mxu0 0
  %680 = vmatpush.bf16.msra.mxu0 0
  %681 = vmatpush.bf16.msra.mxu0 0
  %682 = vmatpush.bf16.msra.mxu0 0
  %683 = vmatpush.bf16.msra.mxu0 0
  %684 = vmatpush.bf16.msra.mxu0 %v672
  %685 = vmatpush.bf16.msra.mxu0 %v671
  %686 = vmatmul.bf16.gmra.mxu0 %v676
  %v687 = vpop.f32.mrf.mxu0
  %v688 = vadd.f32 %v661, %v687
  %v689 = vpop.f32.mrf.mxu0
  %690 = vdwg.mxu0
  %v691 = vxor.u32 %v688, 2147483648
  %v692 = vmul.f32 %v691, 1.442695
  %v693 = vpow.pop %v692
  %v694 = vadd.f32 %v693, 1.0
  %v695 = vrcp.pop %v694
  %v696 = vmul.f32 %v694, %v695
  %v697 = vsub.f32 1.0, %v696
  %v698 = vmul.f32 %v695, %v697
  %v699 = vadd.f32 %v695, %v698
  %vm700 = vweird.f32 %v694
  %vm701 = vweird.f32 %v695
  %vm702 = vmor %vm700, %vm701
  %v703 = vsel %vm702, %v695, %v699
  %v704 = vand.u32 2147483647, %v694
  %vm705 = vcmp.eq.f32.partialorder %v704, 8.507059e+37
  %v706 = vand.u32 %v694, 2147483648
  %v707 = vor.u32 1.1754944e-38, %v706
  %v708 = vsel %vm705, %v707, %v703
  %v709 = vmul.f32 1.0, %v708
  %710 = vst [vmem:[%s11] sm:$0xff] %v709
  // Predicated region
  $region42: #{_lgi_forward.1} parent=0 // pred_check
    _
  $region43: #{_lgi_forward.1} parent=0 // pred_check_branch
    %712 = sbr.rel (0) target = $region45
  $region44: #{_lgi_forward.1} parent=0 // pred_region
    _
  $region45: #{_lgi_forward.1} parent=0 // pred_fallthru
    _
  // Predicated region
  $region46: #{_lgi_forward.1} parent=0 // pred_check
    _
  $region47: #{_lgi_forward.1} parent=0 // pred_check_branch
    %714 = sbr.rel (0) target = $region49
  $region48: #{_lgi_forward.1} parent=0 // pred_region
    _
  $region49: #{_lgi_forward.1} parent=0 // pred_fallthru
    _
  // Predicated region
  $region50: #{_lgi_forward.1} parent=0 // pred_check
    _
  $region51: #{_lgi_forward.1} parent=0 // pred_check_branch
    %716 = sbr.rel (0) target = $region53
  $region52: #{_lgi_forward.1} parent=0 // pred_region
    _
  $region53: #{_lgi_forward.1} parent=0 // pred_fallthru
    _
  // Predicated region
  $region54: #{_lgi_forward.1} parent=0 // pred_check
    _
  $region55: #{_lgi_forward.1} parent=0 // pred_check_branch
    %718 = sbr.rel (0) target = $region57
  $region56: #{_lgi_forward.1} parent=0 // pred_region
    _
  $region57: #{_lgi_forward.1} parent=0 // pred_fallthru
    _

</llo_original>
